<compile_context>
chip_gen: v7x
topology: tpu7x:2x2x1
jax: 0.10.0
libtpu: 0.0.40
codegen_flags: <defaults>
</compile_context>

<pallas_src>
import functools

import jax
import jax.numpy as jnp
from jax.experimental import pallas as pl
from jax.experimental.pallas import tpu as pltpu

LANE = 128            # TPU lane width: feature dims padded to this for dense stores
SUBLANE_PACK = 16     # bf16 sublane packing: batch tiles are multiples of 16 rows
NEG_BIG = -1e30       # logit bias for padded action columns -> softmax prob == 0


def _round_up(n, m):
    return ((n + m - 1) // m) * m


@functools.lru_cache(maxsize=1)
def _device_kind():
    try:
        return jax.devices()[0].device_kind.lower()
    except Exception:  # pragma: no cover - defensive
        return ""


@functools.lru_cache(maxsize=1)
def _vmem_capacity_bytes():
    try:
        return int(pltpu.get_tpu_info().vmem_capacity_bytes)
    except Exception:  # pragma: no cover - defensive
        return 64 * 1024 * 1024   # conservative default: v7x per-TC VMEM


@functools.lru_cache(maxsize=1)
def _softmax_exp_dtype():
    # v5 and older have no bf16 VPU/EUP -> keep the softmax epilogue in f32.
    # v6e / v7x run the exp and the final scale ~2x faster in bf16.
    kind = _device_kind()
    if any(tag in kind for tag in ("v2", "v3", "v4", "v5")):
        return jnp.float32
    return jnp.bfloat16


def policy_forward_kernel(x_ref, w1_ref, b1_ref, w2_ref, b2_ref,
                          wa_ref, ba_ref, out_ref, *, exp_dtype):
    # x: bf16 [TILE_B, num_inputs]; weights: bf16; biases: f32 [1, N_pad].
    x = x_ref[...]

    # h1 = relu(x @ W1 + b1)   (f32 accumulation on the MXU, ReLU in f32)
    h1 = jnp.dot(x, w1_ref[...], preferred_element_type=jnp.float32) + b1_ref[...]
    h1 = jnp.maximum(h1, 0.0)

    # h2 = relu(h1 @ W2 + b2)
    h2 = jnp.dot(h1.astype(jnp.bfloat16), w2_ref[...],
                 preferred_element_type=jnp.float32) + b2_ref[...]
    h2 = jnp.maximum(h2, 0.0)

    # logits = h2 @ Wa + ba    (padded action columns carry a -1e30 bias)
    logits = jnp.dot(h2.astype(jnp.bfloat16), wa_ref[...],
                     preferred_element_type=jnp.float32) + ba_ref[...]

    # Numerically stable softmax over the action axis.
    # Reductions stay f32; exp + scale run in exp_dtype (bf16 on v6e/v7x).
    m = jnp.max(logits, axis=-1, keepdims=True)
    e = jnp.exp((logits - m).astype(exp_dtype))
    denom = jnp.sum(e.astype(jnp.float32), axis=-1, keepdims=True)
    # Approximate EUP reciprocal + one Newton refinement -> ~f32-accurate rows.
    r = pl.reciprocal(denom, approx=True)
    r = r * (2.0 - denom * r)
    out_ref[...] = (e * r.astype(e.dtype)).astype(out_ref.dtype)


def prepare_params(params):
    """One-time lane padding + bf16 casts of the weights.

    Hoisted out of the per-call forward path: call once (or once per optimizer
    step), then pass the returned padded params to policy_forward repeatedly.
    Weights are stored [in_features, out_features]; biases [1, out_features].
    """
    w1, b1 = params["w1"], params["b1"]
    w2, b2 = params["w2"], params["b2"]
    wa, ba = params["wa"], params["ba"]

    hidden = w1.shape[1]
    num_actions = int(wa.shape[1])
    h_pad = _round_up(hidden, LANE)
    a_pad = _round_up(num_actions, LANE)

    padded = {
        # Weights: zero-pad to lane-dense shapes, cast to bf16 (MXU-native).
        "w1": jnp.pad(w1, ((0, 0), (0, h_pad - hidden))).astype(jnp.bfloat16),
        "w2": jnp.pad(w2, ((0, h_pad - hidden), (0, h_pad - hidden))).astype(jnp.bfloat16),
        "wa": jnp.pad(wa, ((0, h_pad - hidden), (0, a_pad - num_actions))).astype(jnp.bfloat16),
        # Biases stay f32.  Padded hidden units: 0 bias (relu(0) == 0).
        # Padded action columns: -1e30 so softmax assigns them exactly 0.
        "b1": jnp.pad(b1.astype(jnp.float32), ((0, 0), (0, h_pad - hidden))),
        "b2": jnp.pad(b2.astype(jnp.float32), ((0, 0), (0, h_pad - hidden))),
        "ba": jnp.pad(ba.astype(jnp.float32), ((0, 0), (0, a_pad - num_actions)),
                      constant_values=NEG_BIG),
    }
    return padded, num_actions


@functools.partial(
    jax.jit,
    static_argnames=("num_actions", "block_b", "trim_output", "out_dtype",
                     "single_buffer_weights"),
)
def policy_forward(state, padded_params, num_actions, *, block_b=2048,
                   trim_output=True, out_dtype=jnp.float32,
                   single_buffer_weights=True):
    """state: [B, num_inputs] f32; padded_params: output of prepare_params.

    Returns softmax action probabilities.  With trim_output=True the result is
    [B, num_actions]; with trim_output=False the padded [B_pad, 128] block is
    returned directly (padded action columns are exactly 0, so sampling /
    argmax is unaffected and the extra slice pass over HBM is skipped).
    """
    w1_p, b1_p = padded_params["w1"], padded_params["b1"]
    w2_p, b2_p = padded_params["w2"], padded_params["b2"]
    wa_p, ba_p = padded_params["wa"], padded_params["ba"]

    B, num_inputs = state.shape
    h_pad = w1_p.shape[1]
    a_pad = wa_p.shape[1]

    # --- batch tiling --------------------------------------------------------
    # Tiles are multiples of 16 rows (bf16 sublane packing).  Split the batch
    # into >= 2 grid steps when possible so v7x's second TensorCore gets work.
    block_b = max(SUBLANE_PACK, _round_up(block_b, SUBLANE_PACK))
    b_ceil = _round_up(B, SUBLANE_PACK)
    tile_b = min(block_b,
                 max(SUBLANE_PACK, _round_up(pl.cdiv(b_ceil, 2), SUBLANE_PACK)))
    b_pad = _round_up(B, tile_b)
    grid = (b_pad // tile_b,)

    # Per-call work on the only B-scaled input: pad batch rows, cast to bf16.
    x_p = jnp.pad(state, ((0, b_pad - B), (0, 0))).astype(jnp.bfloat16)

    # --- VMEM budget (real buffer accounting, generation-aware cap) ----------
    out_itemsize = jnp.dtype(out_dtype).itemsize
    weight_buffers = 1 if single_buffer_weights else 2
    resident_bytes = weight_buffers * (
        (w1_p.size + w2_p.size + wa_p.size) * 2
        + (b1_p.size + b2_p.size + ba_p.size) * 4)
    pipelined_bytes = 2 * tile_b * num_inputs * 2 \
        + 2 * tile_b * a_pad * out_itemsize              # double-buffered x / out
    act_bytes = 3 * tile_b * max(h_pad, a_pad) * 4       # h1 / h2 / logits f32
    needed = resident_bytes + pipelined_bytes + act_bytes
    cap = max(int(_vmem_capacity_bytes() * 0.625), 16 * 1024 * 1024)
    vmem_limit = int(min(max(int(needed * 1.5) + (4 << 20), 16 << 20), cap))

    cost = pl.CostEstimate(
        flops=2 * b_pad * (num_inputs * h_pad + h_pad * h_pad + h_pad * a_pad),
        transcendentals=b_pad * a_pad,
        bytes_accessed=x_p.size * 2
        + (w1_p.size + w2_p.size + wa_p.size) * 2
        + (b1_p.size + b2_p.size + ba_p.size) * 4
        + b_pad * a_pad * out_itemsize,
    )

    # Weights never change across the batch grid -> constant index_map, and
    # (optionally) single-buffered so they only occupy one VMEM copy.
    def _resident_spec(shape):
        if single_buffer_weights:
            return pl.BlockSpec(shape, lambda i: (0, 0),
                                pipeline_mode=pl.Buffered(buffer_count=1))
        return pl.BlockSpec(shape, lambda i: (0, 0))

    kernel = functools.partial(policy_forward_kernel,
                               exp_dtype=_softmax_exp_dtype())

    out_p = pl.pallas_call(
        kernel,
        out_shape=jax.ShapeDtypeStruct((b_pad, a_pad), out_dtype),
        grid=grid,
        in_specs=[
            pl.BlockSpec((tile_b, num_inputs), lambda i: (i, 0)),  # x tile (pipelined)
            _resident_spec((num_inputs, h_pad)),                   # W1 (resident)
            _resident_spec((1, h_pad)),                            # b1
            _resident_spec((h_pad, h_pad)),                        # W2
            _resident_spec((1, h_pad)),                            # b2
            _resident_spec((h_pad, a_pad)),                        # Wa
            _resident_spec((1, a_pad)),                            # ba
        ],
        out_specs=pl.BlockSpec((tile_b, a_pad), lambda i: (i, 0)),
        compiler_params=pltpu.CompilerParams(
            dimension_semantics=("parallel",),
            vmem_limit_bytes=vmem_limit,
        ),
        cost_estimate=cost,
    )(x_p, w1_p, b1_p, w2_p, b2_p, wa_p, ba_p)

    if trim_output:
        return out_p[:B, :num_actions]
    return out_p


def policy_forward_ref(state, params):
    """Pure-JAX f32 reference matching the PyTorch module forward."""
    h1 = jax.nn.relu(state @ params["w1"] + params["b1"])
    h2 = jax.nn.relu(h1 @ params["w2"] + params["b2"])
    return jax.nn.softmax(h2 @ params["wa"] + params["ba"], axis=1)


def init_params(key, num_inputs, num_actions, hidden_size):
    """PyTorch nn.Linear default init (U[-1/sqrt(fan_in), 1/sqrt(fan_in)]).
    Weights stored transposed as [in_features, out_features]; biases [1, out]."""
    def linear(key, fan_in, fan_out):
        kw, kb = jax.random.split(key)
        bound = 1.0 / jnp.sqrt(fan_in)
        w = jax.random.uniform(kw, (fan_in, fan_out), jnp.float32, -bound, bound)
        b = jax.random.uniform(kb, (1, fan_out), jnp.float32, -bound, bound)
        return w, b

    k1, k2, k3 = jax.random.split(key, 3)
    w1, b1 = linear(k1, num_inputs, hidden_size)
    w2, b2 = linear(k2, hidden_size, hidden_size)
    wa, ba = linear(k3, hidden_size, num_actions)
    return {"w1": w1, "b1": b1, "w2": w2, "b2": b2, "wa": wa, "ba": ba}


if __name__ == "__main__":
    # Small shapes consistent with the module: a batch of states.
    B, num_inputs, num_actions, hidden_size = 8, 4, 4, 32

    key = jax.random.PRNGKey(0)
    k_params, k_state = jax.random.split(key)
    params = init_params(k_params, num_inputs, num_actions, hidden_size)
    state = jax.random.normal(k_state, (B, num_inputs), jnp.float32)

    # One-time weight padding + bf16 cast (hoisted out of the forward path).
    padded_params, n_act = prepare_params(params)

    try:
        probs = policy_forward(state, padded_params, n_act)
        probs = jax.block_until_ready(probs)
    except Exception:
        # Fallback for jax builds without BlockSpec.pipeline_mode support:
        # identical kernel, weights simply stay double-buffered.
        probs = policy_forward(state, padded_params, n_act,
                               single_buffer_weights=False)
        probs = jax.block_until_ready(probs)

    assert probs.shape == (B, num_actions)
    row_sums = jnp.sum(probs, axis=1)
    assert bool(jnp.all(probs >= 0.0))
    # Newton-refined reciprocal -> rows sum to ~f32 accuracy.
    assert bool(jnp.all(jnp.abs(row_sums - 1.0) < 1e-2))

    # Compare against the pure-JAX f32 reference (bf16 matmul tolerance).
    ref = policy_forward_ref(state, params)
    assert bool(jnp.max(jnp.abs(probs.astype(jnp.float32) - ref)) < 3e-2)

    print("KERNEL_OK")
</pallas_src>

<mosaic_0001>
module attributes {stable_mosaic.version = 11 : i64} {
  func.func @policy_forward_kernel(%arg0: i32, %arg1: memref<16x4xbf16, #tpu.memory_space<vmem>>, %arg2: memref<4x128xbf16, #tpu.memory_space<vmem>>, %arg3: memref<1x128xf32, #tpu.memory_space<vmem>>, %arg4: memref<128x128xbf16, #tpu.memory_space<vmem>>, %arg5: memref<1x128xf32, #tpu.memory_space<vmem>>, %arg6: memref<128x128xbf16, #tpu.memory_space<vmem>>, %arg7: memref<1x128xf32, #tpu.memory_space<vmem>>, %arg8: memref<16x128xf32, #tpu.memory_space<vmem>>) attributes {dimension_semantics = [#tpu.dimension_semantics<parallel>], iteration_bounds = array<i64: 1>, scalar_prefetch = 0 : i64, scratch_operands = 0 : i64, tpu.core_type = #tpu.core_type<tc>, window_params = [{transform_indices = @transform_0, window_bounds = array<i64: 16, 4>}, {pipeline_mode = #tpu.pipeline_mode<synchronous>, transform_indices = @transform_1, window_bounds = array<i64: 4, 128>}, {pipeline_mode = #tpu.pipeline_mode<synchronous>, transform_indices = @transform_2, window_bounds = array<i64: 1, 128>}, {pipeline_mode = #tpu.pipeline_mode<synchronous>, transform_indices = @transform_3, window_bounds = array<i64: 128, 128>}, {pipeline_mode = #tpu.pipeline_mode<synchronous>, transform_indices = @transform_4, window_bounds = array<i64: 1, 128>}, {pipeline_mode = #tpu.pipeline_mode<synchronous>, transform_indices = @transform_5, window_bounds = array<i64: 128, 128>}, {pipeline_mode = #tpu.pipeline_mode<synchronous>, transform_indices = @transform_6, window_bounds = array<i64: 1, 128>}, {transform_indices = @transform_7, window_bounds = array<i64: 16, 128>}]} {
    %c0 = arith.constant 0 : index
    %c0_0 = arith.constant 0 : index
    %0 = vector.load %arg1[%c0, %c0_0] : memref<16x4xbf16, #tpu.memory_space<vmem>>, vector<16x4xbf16>
    %c0_1 = arith.constant 0 : index
    %c0_2 = arith.constant 0 : index
    %1 = vector.load %arg2[%c0_1, %c0_2] : memref<4x128xbf16, #tpu.memory_space<vmem>>, vector<4x128xbf16>
    %cst = arith.constant dense<0.000000e+00> : vector<16x128xf32>
    %2 = tpu.matmul %0, %1, %cst {dimension_numbers = #tpu.dot_dimension_numbers<[1], [0], [0], [1], [0, 0, 1, 1], [], []>} : vector<16x4xbf16>, vector<4x128xbf16>, vector<16x128xf32> -> vector<16x128xf32>
    %c0_3 = arith.constant 0 : index
    %c0_4 = arith.constant 0 : index
    %3 = vector.load %arg3[%c0_3, %c0_4] : memref<1x128xf32, #tpu.memory_space<vmem>>, vector<1x128xf32>
    %4 = vector.broadcast %3 : vector<1x128xf32> to vector<16x128xf32>
    %5 = arith.addf %2, %4 : vector<16x128xf32>
    %cst_5 = arith.constant 0.000000e+00 : f32
    %6 = vector.broadcast %cst_5 : f32 to vector<16x128xf32>
    %7 = arith.maximumf %5, %6 : vector<16x128xf32>
    %8 = arith.truncf %7 : vector<16x128xf32> to vector<16x128xbf16>
    %c0_6 = arith.constant 0 : index
    %c0_7 = arith.constant 0 : index
    %9 = vector.load %arg4[%c0_6, %c0_7] : memref<128x128xbf16, #tpu.memory_space<vmem>>, vector<128x128xbf16>
    %cst_8 = arith.constant dense<0.000000e+00> : vector<16x128xf32>
    %10 = tpu.matmul %8, %9, %cst_8 {dimension_numbers = #tpu.dot_dimension_numbers<[1], [0], [0], [1], [0, 0, 1, 1], [], []>} : vector<16x128xbf16>, vector<128x128xbf16>, vector<16x128xf32> -> vector<16x128xf32>
    %c0_9 = arith.constant 0 : index
    %c0_10 = arith.constant 0 : index
    %11 = vector.load %arg5[%c0_9, %c0_10] : memref<1x128xf32, #tpu.memory_space<vmem>>, vector<1x128xf32>
    %12 = vector.broadcast %11 : vector<1x128xf32> to vector<16x128xf32>
    %13 = arith.addf %10, %12 : vector<16x128xf32>
    %cst_11 = arith.constant 0.000000e+00 : f32
    %14 = vector.broadcast %cst_11 : f32 to vector<16x128xf32>
    %15 = arith.maximumf %13, %14 : vector<16x128xf32>
    %16 = arith.truncf %15 : vector<16x128xf32> to vector<16x128xbf16>
    %c0_12 = arith.constant 0 : index
    %c0_13 = arith.constant 0 : index
    %17 = vector.load %arg6[%c0_12, %c0_13] : memref<128x128xbf16, #tpu.memory_space<vmem>>, vector<128x128xbf16>
    %cst_14 = arith.constant dense<0.000000e+00> : vector<16x128xf32>
    %18 = tpu.matmul %16, %17, %cst_14 {dimension_numbers = #tpu.dot_dimension_numbers<[1], [0], [0], [1], [0, 0, 1, 1], [], []>} : vector<16x128xbf16>, vector<128x128xbf16>, vector<16x128xf32> -> vector<16x128xf32>
    %c0_15 = arith.constant 0 : index
    %c0_16 = arith.constant 0 : index
    %19 = vector.load %arg7[%c0_15, %c0_16] : memref<1x128xf32, #tpu.memory_space<vmem>>, vector<1x128xf32>
    %20 = vector.broadcast %19 : vector<1x128xf32> to vector<16x128xf32>
    %21 = arith.addf %18, %20 : vector<16x128xf32>
    %cst_17 = arith.constant dense<0xFF800000> : vector<16xf32>
    %22 = vector.multi_reduction <maximumf>, %21, %cst_17 [1] : vector<16x128xf32> to vector<16xf32>
    %23 = vector.shape_cast %22 : vector<16xf32> to vector<16x1xf32>
    %24 = vector.broadcast %23 : vector<16x1xf32> to vector<16x128xf32>
    %25 = arith.subf %21, %24 : vector<16x128xf32>
    %26 = arith.truncf %25 : vector<16x128xf32> to vector<16x128xbf16>
    %27 = math.exp %26 : vector<16x128xbf16>
    %28 = arith.extf %27 : vector<16x128xbf16> to vector<16x128xf32>
    %cst_18 = arith.constant dense<0.000000e+00> : vector<16xf32>
    %29 = vector.multi_reduction <add>, %28, %cst_18 [1] : vector<16x128xf32> to vector<16xf32>
    %30 = vector.shape_cast %29 : vector<16xf32> to vector<16x1xf32>
    %31 = tpu.reciprocal %30 {approx = true} : vector<16x1xf32> -> vector<16x1xf32>
    %32 = arith.mulf %30, %31 : vector<16x1xf32>
    %cst_19 = arith.constant 2.000000e+00 : f32
    %33 = vector.broadcast %cst_19 : f32 to vector<16x1xf32>
    %34 = arith.subf %33, %32 : vector<16x1xf32>
    %35 = arith.mulf %31, %34 : vector<16x1xf32>
    %36 = arith.truncf %35 : vector<16x1xf32> to vector<16x1xbf16>
    %37 = vector.broadcast %36 : vector<16x1xbf16> to vector<16x128xbf16>
    %38 = arith.mulf %27, %37 : vector<16x128xbf16>
    %39 = arith.extf %38 : vector<16x128xbf16> to vector<16x128xf32>
    %c0_20 = arith.constant 0 : index
    %c0_21 = arith.constant 0 : index
    %40 = vector.load %arg8[%c0_20, %c0_21] : memref<16x128xf32, #tpu.memory_space<vmem>>, vector<16x128xf32>
    tpu.vector_store %arg8[%c0_20, %c0_21], %39 {strides = array<i32>} : memref<16x128xf32, #tpu.memory_space<vmem>>, vector<16x128xf32>,
    return
  }
  func.func @transform_0(%arg0: i32) -> (i32, i32) {
    %c0_i32 = arith.constant 0 : i32
    %c0_i32_0 = arith.constant 0 : i32
    return %arg0, %c0_i32 : i32, i32
  }
  func.func @transform_1(%arg0: i32) -> (i32, i32) {
    %c0_i32 = arith.constant 0 : i32
    %c0_i32_0 = arith.constant 0 : i32
    %c0_i32_1 = arith.constant 0 : i32
    return %c0_i32, %c0_i32_0 : i32, i32
  }
  func.func @transform_2(%arg0: i32) -> (i32, i32) {
    %c0_i32 = arith.constant 0 : i32
    %c0_i32_0 = arith.constant 0 : i32
    %c0_i32_1 = arith.constant 0 : i32
    return %c0_i32, %c0_i32_0 : i32, i32
  }
  func.func @transform_3(%arg0: i32) -> (i32, i32) {
    %c0_i32 = arith.constant 0 : i32
    %c0_i32_0 = arith.constant 0 : i32
    %c0_i32_1 = arith.constant 0 : i32
    return %c0_i32, %c0_i32_0 : i32, i32
  }
  func.func @transform_4(%arg0: i32) -> (i32, i32) {
    %c0_i32 = arith.constant 0 : i32
    %c0_i32_0 = arith.constant 0 : i32
    %c0_i32_1 = arith.constant 0 : i32
    return %c0_i32, %c0_i32_0 : i32, i32
  }
  func.func @transform_5(%arg0: i32) -> (i32, i32) {
    %c0_i32 = arith.constant 0 : i32
    %c0_i32_0 = arith.constant 0 : i32
    %c0_i32_1 = arith.constant 0 : i32
    return %c0_i32, %c0_i32_0 : i32, i32
  }
  func.func @transform_6(%arg0: i32) -> (i32, i32) {
    %c0_i32 = arith.constant 0 : i32
    %c0_i32_0 = arith.constant 0 : i32
    %c0_i32_1 = arith.constant 0 : i32
    return %c0_i32, %c0_i32_0 : i32, i32
  }
  func.func @transform_7(%arg0: i32) -> (i32, i32) {
    %c0_i32 = arith.constant 0 : i32
    %c0_i32_0 = arith.constant 0 : i32
    return %arg0, %c0_i32 : i32, i32
  }
}

module attributes {stable_mosaic.version = 11 : i64} {
  func.func @policy_forward_kernel(%arg0: i32, %arg1: memref<16x4xbf16, #tpu.memory_space<vmem>>, %arg2: memref<4x128xbf16, #tpu.memory_space<vmem>>, %arg3: memref<1x128xf32, #tpu.memory_space<vmem>>, %arg4: memref<128x128xbf16, #tpu.memory_space<vmem>>, %arg5: memref<1x128xf32, #tpu.memory_space<vmem>>, %arg6: memref<128x128xbf16, #tpu.memory_space<vmem>>, %arg7: memref<1x128xf32, #tpu.memory_space<vmem>>, %arg8: memref<16x128xf32, #tpu.memory_space<vmem>>) attributes {dimension_semantics = [#tpu.dimension_semantics<parallel>], iteration_bounds = array<i64: 1>, scalar_prefetch = 0 : i64, scratch_operands = 0 : i64, tpu.core_type = #tpu.core_type<tc>, window_params = [{transform_indices = @transform_0, window_bounds = array<i64: 16, 4>}, {pipeline_mode = #tpu.pipeline_mode<synchronous>, transform_indices = @transform_1, window_bounds = array<i64: 4, 128>}, {pipeline_mode = #tpu.pipeline_mode<synchronous>, transform_indices = @transform_2, window_bounds = array<i64: 1, 128>}, {pipeline_mode = #tpu.pipeline_mode<synchronous>, transform_indices = @transform_3, window_bounds = array<i64: 128, 128>}, {pipeline_mode = #tpu.pipeline_mode<synchronous>, transform_indices = @transform_4, window_bounds = array<i64: 1, 128>}, {pipeline_mode = #tpu.pipeline_mode<synchronous>, transform_indices = @transform_5, window_bounds = array<i64: 128, 128>}, {pipeline_mode = #tpu.pipeline_mode<synchronous>, transform_indices = @transform_6, window_bounds = array<i64: 1, 128>}, {transform_indices = @transform_7, window_bounds = array<i64: 16, 128>}]} {
    %c0 = arith.constant 0 : index
    %c0_0 = arith.constant 0 : index
    %0 = vector.load %arg1[%c0, %c0_0] : memref<16x4xbf16, #tpu.memory_space<vmem>>, vector<16x4xbf16>
    %c0_1 = arith.constant 0 : index
    %c0_2 = arith.constant 0 : index
    %1 = vector.load %arg2[%c0_1, %c0_2] : memref<4x128xbf16, #tpu.memory_space<vmem>>, vector<4x128xbf16>
    %cst = arith.constant dense<0.000000e+00> : vector<16x128xf32>
    %2 = tpu.matmul %0, %1, %cst {dimension_numbers = #tpu.dot_dimension_numbers<[1], [0], [0], [1], [0, 0, 1, 1], [], []>} : vector<16x4xbf16>, vector<4x128xbf16>, vector<16x128xf32> -> vector<16x128xf32>
    %c0_3 = arith.constant 0 : index
    %c0_4 = arith.constant 0 : index
    %3 = vector.load %arg3[%c0_3, %c0_4] : memref<1x128xf32, #tpu.memory_space<vmem>>, vector<1x128xf32>
    %4 = vector.broadcast %3 : vector<1x128xf32> to vector<16x128xf32>
    %5 = arith.addf %2, %4 : vector<16x128xf32>
    %cst_5 = arith.constant 0.000000e+00 : f32
    %6 = vector.broadcast %cst_5 : f32 to vector<16x128xf32>
    %7 = arith.maximumf %5, %6 : vector<16x128xf32>
    %8 = arith.truncf %7 : vector<16x128xf32> to vector<16x128xbf16>
    %c0_6 = arith.constant 0 : index
    %c0_7 = arith.constant 0 : index
    %9 = vector.load %arg4[%c0_6, %c0_7] : memref<128x128xbf16, #tpu.memory_space<vmem>>, vector<128x128xbf16>
    %cst_8 = arith.constant dense<0.000000e+00> : vector<16x128xf32>
    %10 = tpu.matmul %8, %9, %cst_8 {dimension_numbers = #tpu.dot_dimension_numbers<[1], [0], [0], [1], [0, 0, 1, 1], [], []>} : vector<16x128xbf16>, vector<128x128xbf16>, vector<16x128xf32> -> vector<16x128xf32>
    %c0_9 = arith.constant 0 : index
    %c0_10 = arith.constant 0 : index
    %11 = vector.load %arg5[%c0_9, %c0_10] : memref<1x128xf32, #tpu.memory_space<vmem>>, vector<1x128xf32>
    %12 = vector.broadcast %11 : vector<1x128xf32> to vector<16x128xf32>
    %13 = arith.addf %10, %12 : vector<16x128xf32>
    %cst_11 = arith.constant 0.000000e+00 : f32
    %14 = vector.broadcast %cst_11 : f32 to vector<16x128xf32>
    %15 = arith.maximumf %13, %14 : vector<16x128xf32>
    %16 = arith.truncf %15 : vector<16x128xf32> to vector<16x128xbf16>
    %c0_12 = arith.constant 0 : index
    %c0_13 = arith.constant 0 : index
    %17 = vector.load %arg6[%c0_12, %c0_13] : memref<128x128xbf16, #tpu.memory_space<vmem>>, vector<128x128xbf16>
    %cst_14 = arith.constant dense<0.000000e+00> : vector<16x128xf32>
    %18 = tpu.matmul %16, %17, %cst_14 {dimension_numbers = #tpu.dot_dimension_numbers<[1], [0], [0], [1], [0, 0, 1, 1], [], []>} : vector<16x128xbf16>, vector<128x128xbf16>, vector<16x128xf32> -> vector<16x128xf32>
    %c0_15 = arith.constant 0 : index
    %c0_16 = arith.constant 0 : index
    %19 = vector.load %arg7[%c0_15, %c0_16] : memref<1x128xf32, #tpu.memory_space<vmem>>, vector<1x128xf32>
    %20 = vector.broadcast %19 : vector<1x128xf32> to vector<16x128xf32>
    %21 = arith.addf %18, %20 : vector<16x128xf32>
    %cst_17 = arith.constant dense<0xFF800000> : vector<16xf32>
    %22 = vector.multi_reduction <maximumf>, %21, %cst_17 [1] : vector<16x128xf32> to vector<16xf32>
    %23 = vector.shape_cast %22 : vector<16xf32> to vector<16x1xf32>
    %24 = vector.broadcast %23 : vector<16x1xf32> to vector<16x128xf32>
    %25 = arith.subf %21, %24 : vector<16x128xf32>
    %26 = arith.truncf %25 : vector<16x128xf32> to vector<16x128xbf16>
    %27 = math.exp %26 : vector<16x128xbf16>
    %28 = arith.extf %27 : vector<16x128xbf16> to vector<16x128xf32>
    %cst_18 = arith.constant dense<0.000000e+00> : vector<16xf32>
    %29 = vector.multi_reduction <add>, %28, %cst_18 [1] : vector<16x128xf32> to vector<16xf32>
    %30 = vector.shape_cast %29 : vector<16xf32> to vector<16x1xf32>
    %31 = tpu.reciprocal %30 {approx = true} : vector<16x1xf32> -> vector<16x1xf32>
    %32 = arith.mulf %30, %31 : vector<16x1xf32>
    %cst_19 = arith.constant 2.000000e+00 : f32
    %33 = vector.broadcast %cst_19 : f32 to vector<16x1xf32>
    %34 = arith.subf %33, %32 : vector<16x1xf32>
    %35 = arith.mulf %31, %34 : vector<16x1xf32>
    %36 = arith.truncf %35 : vector<16x1xf32> to vector<16x1xbf16>
    %37 = vector.broadcast %36 : vector<16x1xbf16> to vector<16x128xbf16>
    %38 = arith.mulf %27, %37 : vector<16x128xbf16>
    %39 = arith.extf %38 : vector<16x128xbf16> to vector<16x128xf32>
    %c0_20 = arith.constant 0 : index
    %c0_21 = arith.constant 0 : index
    %40 = vector.load %arg8[%c0_20, %c0_21] : memref<16x128xf32, #tpu.memory_space<vmem>>, vector<16x128xf32>
    tpu.vector_store %arg8[%c0_20, %c0_21], %39 {strides = array<i32>} : memref<16x128xf32, #tpu.memory_space<vmem>>, vector<16x128xf32>,
    return
  }
  func.func @transform_0(%arg0: i32) -> (i32, i32) {
    %c0_i32 = arith.constant 0 : i32
    %c0_i32_0 = arith.constant 0 : i32
    return %arg0, %c0_i32 : i32, i32
  }
  func.func @transform_1(%arg0: i32) -> (i32, i32) {
    %c0_i32 = arith.constant 0 : i32
    %c0_i32_0 = arith.constant 0 : i32
    %c0_i32_1 = arith.constant 0 : i32
    return %c0_i32, %c0_i32_0 : i32, i32
  }
  func.func @transform_2(%arg0: i32) -> (i32, i32) {
    %c0_i32 = arith.constant 0 : i32
    %c0_i32_0 = arith.constant 0 : i32
    %c0_i32_1 = arith.constant 0 : i32
    return %c0_i32, %c0_i32_0 : i32, i32
  }
  func.func @transform_3(%arg0: i32) -> (i32, i32) {
    %c0_i32 = arith.constant 0 : i32
    %c0_i32_0 = arith.constant 0 : i32
    %c0_i32_1 = arith.constant 0 : i32
    return %c0_i32, %c0_i32_0 : i32, i32
  }
  func.func @transform_4(%arg0: i32) -> (i32, i32) {
    %c0_i32 = arith.constant 0 : i32
    %c0_i32_0 = arith.constant 0 : i32
    %c0_i32_1 = arith.constant 0 : i32
    return %c0_i32, %c0_i32_0 : i32, i32
  }
  func.func @transform_5(%arg0: i32) -> (i32, i32) {
    %c0_i32 = arith.constant 0 : i32
    %c0_i32_0 = arith.constant 0 : i32
    %c0_i32_1 = arith.constant 0 : i32
    return %c0_i32, %c0_i32_0 : i32, i32
  }
  func.func @transform_6(%arg0: i32) -> (i32, i32) {
    %c0_i32 = arith.constant 0 : i32
    %c0_i32_0 = arith.constant 0 : i32
    %c0_i32_1 = arith.constant 0 : i32
    return %c0_i32, %c0_i32_0 : i32, i32
  }
  func.func @transform_7(%arg0: i32) -> (i32, i32) {
    %c0_i32 = arith.constant 0 : i32
    %c0_i32_0 = arith.constant 0 : i32
    return %arg0, %c0_i32 : i32, i32
  }
}

</mosaic_0001>

<llo_original>
// kernel: policy_forward.1
$region0: #{policy_forward.1}
  #allocation0 [shape = 'u32[]', space=smem, size = 0x4, offset = 0x4, fixed_abs, tag = 'smem constant byte address 0x4 - core index']
  #allocation1 [shape = 'u32[144,128]{1,0:T(1,128)}', space=vmem, size = 0x12000, scoped, tag = 'internal scratch']
  %s0 = inlined_call_operand.vmem [shape: bf16[16,4], index: 0, kind: input, shape index: {}]
  %s1 = inlined_call_operand.vmem [shape: bf16[4,128], index: 1, kind: input, shape index: {}]
  %s2 = inlined_call_operand.vmem [shape: f32[1,128], index: 2, kind: input, shape index: {}]
  %s3 = inlined_call_operand.hbm [shape: bf16[128,128], index: 3, kind: input, shape index: {}]
  %s4 = inlined_call_operand.vmem [shape: f32[1,128], index: 4, kind: input, shape index: {}]
  %s5 = inlined_call_operand.hbm [shape: bf16[128,128], index: 5, kind: input, shape index: {}]
  %s6 = inlined_call_operand.vmem [shape: f32[1,128], index: 6, kind: input, shape index: {}]
  %s7 = inlined_call_operand.vmem [shape: f32[16,128], index: 7, kind: output, shape index: {}]
  %s8 = sld [smem:[#allocation0]]
  $region46: #{policy_forward.1} parent=0
    _
  %s10 = ssub.s32 1, %s8
  %s11 = scalar_select 0, %s10, %s8
  $region1: #{policy_forward.1} parent=0
    #allocation2 [shape = 'u8[32768]{0}', space=vmem, size = 0x8000, scoped, tag = 'input window, operand 3, single buffered']
    #allocation3 [shape = 's32[1]{0}', space=sflag, size = 0x4, scoped, tag = 'scoped memory for policy_forward.1']
    #allocation4 [shape = 'u8[32768]{0}', space=vmem, size = 0x8000, scoped, tag = 'input window, operand 5, single buffered']
    #allocation5 [shape = 's32[1]{0}', space=sflag, size = 0x4, scoped, tag = 'scoped memory for policy_forward.1']
    %12 = vsyncpa [#allocation3], 0
    %13 = vsyncpa [#allocation5], 0
    // Predicated region
    $region2: #{policy_forward.1} parent=1 // pred_check
      _
    $region3: #{policy_forward.1} parent=1 // pred_check_branch
      %15 = sbr.rel (0) target = $region5
    $region4: #{policy_forward.1} parent=1 // pred_region
      _
    $region5: #{policy_forward.1} parent=1 // pred_fallthru
      _
    // Predicated region
    $region6: #{policy_forward.1} parent=1 // pred_check
      _
    $region7: #{policy_forward.1} parent=1 // pred_check_branch
      %17 = sbr.rel (0) target = $region9
    $region8: #{policy_forward.1} parent=1 // pred_region
      _
    $region9: #{policy_forward.1} parent=1 // pred_fallthru
      _
    // Predicated region
    $region10: #{policy_forward.1} parent=1 // pred_check
      _
    $region11: #{policy_forward.1} parent=1 // pred_check_branch
      %19 = sbr.rel (0) target = $region13
    $region12: #{policy_forward.1} parent=1 // pred_region
      _
    $region13: #{policy_forward.1} parent=1 // pred_fallthru
      _
    // Predicated region
    $region14: #{policy_forward.1} parent=1 // pred_check
      _
    $region15: #{policy_forward.1} parent=1 // pred_check_branch
      %21 = sbr.rel (0) target = $region17
    $region16: #{policy_forward.1} parent=1 // pred_region
      %s23 = ssub.s32 1024, 1024
      %24 = vsyncadd [#allocation3], %s23
      %s25 = sshll.u32 [#allocation2], 4
      %s26 = int_to_ptr.vmem [resolvable:$true] %s25
      %31 = dma.hbm_to_vmem [thread:$0]  %s3, 1024, %s26, [#allocation3], 64, 64, 4
    $region17: #{policy_forward.1} parent=1 // pred_fallthru
      _
    // Predicated region
    $region18: #{policy_forward.1} parent=1 // pred_check
      _
    $region19: #{policy_forward.1} parent=1 // pred_check_branch
      %33 = sbr.rel (0) target = $region21
    $region20: #{policy_forward.1} parent=1 // pred_region
      _
    $region21: #{policy_forward.1} parent=1 // pred_fallthru
      _
    // Predicated region
    $region22: #{policy_forward.1} parent=1 // pred_check
      _
    $region23: #{policy_forward.1} parent=1 // pred_check_branch
      %35 = sbr.rel (0) target = $region25
    $region24: #{policy_forward.1} parent=1 // pred_region
      %s37 = ssub.s32 1024, 1024
      %38 = vsyncadd [#allocation5], %s37
      %s39 = sshll.u32 [#allocation4], 4
      %s40 = int_to_ptr.vmem [resolvable:$true] %s39
      %45 = dma.hbm_to_vmem [thread:$0]  %s5, 1024, %s40, [#allocation5], 64, 64, 4
    $region25: #{policy_forward.1} parent=1 // pred_fallthru
      _
    // Predicated region
    $region26: #{policy_forward.1} parent=1 // pred_check
      _
    $region27: #{policy_forward.1} parent=1 // pred_check_branch
      %47 = sbr.rel (0) target = $region29
    $region28: #{policy_forward.1} parent=1 // pred_region
      _
    $region29: #{policy_forward.1} parent=1 // pred_fallthru
      _
    // Predicated region
    $region30: #{policy_forward.1} parent=1 // pred_check
      _
    $region31: #{policy_forward.1} parent=1 // pred_check_branch
      %49 = sbr.rel (0) target = $region33
    $region32: #{policy_forward.1} parent=1 // pred_region
      %50 = dma.done [#allocation3], 1024
    $region33: #{policy_forward.1} parent=1 // pred_fallthru
      _
    // Predicated region
    $region34: #{policy_forward.1} parent=1 // pred_check
      _
    $region35: #{policy_forward.1} parent=1 // pred_check_branch
      %52 = sbr.rel (0) target = $region37
    $region36: #{policy_forward.1} parent=1 // pred_region
      %53 = dma.done [#allocation5], 1024
    $region37: #{policy_forward.1} parent=1 // pred_fallthru
      _
    %v55 = vld [vmem:[%s0] sm:$0xf]
    %v56 = vld [vmem:[%s0 + $0x4] sm:$0xf]
    %v57 = vld [vmem:[%s1] sm:$0x3]
    %v58 = vld [vmem:[%s2] sm:$0x1]
    %v60 = vlaneseq
    %v61 = vshrl.u32 %v60, 7
    %v62 = vsub.s32 0, %v61
    %v63 = vrot.slane %v58, %v62
    %v67 = vunpack.c.l.b16 %v55
    %v68 = vunpack.c.l.b16 %v56
    %v69 = vpack.c.b16 %v68, %v67
    %vm70 = vcmask 31744
    %v72 = vsel %vm70, %v69, 0
    %vm74 = vcmask 1041408
    %v76 = vsel %vm74, %v57, 0
    %78 = vmatprep.subr.bf16.mxu0 0
    %79 = vmatpush1.bf16.msra.mxu0 %v76
    %80 = vmatprep.subr.bf16.mxu0 0
    %81 = vmatpush1.bf16.msra.mxu0 0
    %82 = vmatprep.subr.bf16.mxu0 0
    %83 = vmatpush1.bf16.msra.mxu0 0
    %84 = vmatprep.subr.bf16.mxu0 0
    %85 = vmatpush1.bf16.msra.mxu0 0
    %86 = vmatprep.subr.bf16.mxu0 0
    %87 = vmatpush1.bf16.msra.mxu0 0
    %88 = vmatprep.subr.bf16.mxu0 0
    %89 = vmatpush1.bf16.msra.mxu0 0
    %90 = vmatprep.subr.bf16.mxu0 0
    %91 = vmatpush1.bf16.msra.mxu0 0
    %92 = vmatprep.subr.bf16.mxu0 0
    %93 = vmatpush1.bf16.msra.mxu0 0
    %94 = vmatprep.subr.bf16.mxu0 0
    %95 = vmatpush1.bf16.msra.mxu0 0
    %96 = vmatprep.subr.bf16.mxu0 0
    %97 = vmatpush1.bf16.msra.mxu0 0
    %98 = vmatprep.subr.bf16.mxu0 0
    %99 = vmatpush1.bf16.msra.mxu0 0
    %100 = vmatprep.subr.bf16.mxu0 0
    %101 = vmatpush1.bf16.msra.mxu0 0
    %102 = vmatprep.subr.bf16.mxu0 0
    %103 = vmatpush1.bf16.msra.mxu0 0
    %104 = vmatprep.subr.bf16.mxu0 0
    %105 = vmatpush1.bf16.msra.mxu0 0
    %106 = vmatprep.subr.bf16.mxu0 0
    %107 = vmatpush1.bf16.msra.mxu0 0
    %108 = vmatprep.subr.bf16.mxu0 0
    %109 = vmatpush1.bf16.msra.mxu0 0
    %110 = vmatprep.mubr.bf16.mxu0 0
    %111 = vmatmul.mubr.bf16.gmra.mrb[0].mxu0 %v72
    %v112 = vpop.f32.mrb[0].mxu0
    %v113 = vadd.f32 %v63, %v112
    %v114 = vpop.f32.mrb[0].mxu0
    %v115 = vpop.f32.mrb[0].mxu0
    %v116 = vadd.f32 %v63, %v115
    %v117 = vpop.f32.mrb[0].mxu0
    %118 = vdwg.mxu0
    %v119 = vmax.f32 %v113, 0.0
    %v120 = vmax.f32 %v116, 0.0
    %v121 = vpack.c.bf16 %v120, %v119
    %v122 = vld [vmem:[#allocation2] sm:$0xf]
    %v123 = vld [vmem:[#allocation2 + $0x4] sm:$0xf]
    %v124 = vld [vmem:[#allocation2 + $0x8] sm:$0xf]
    %v125 = vld [vmem:[#allocation2 + $0xc] sm:$0xf]
    %v126 = vld [vmem:[#allocation2 + $0x10] sm:$0xf]
    %v127 = vld [vmem:[#allocation2 + $0x14] sm:$0xf]
    %v128 = vld [vmem:[#allocation2 + $0x18] sm:$0xf]
    %v129 = vld [vmem:[#allocation2 + $0x1c] sm:$0xf]
    %v130 = vld [vmem:[#allocation2 + $0x20] sm:$0xf]
    %v131 = vld [vmem:[#allocation2 + $0x24] sm:$0xf]
    %v132 = vld [vmem:[#allocation2 + $0x28] sm:$0xf]
    %v133 = vld [vmem:[#allocation2 + $0x2c] sm:$0xf]
    %v134 = vld [vmem:[#allocation2 + $0x30] sm:$0xf]
    %v135 = vld [vmem:[#allocation2 + $0x34] sm:$0xf]
    %v136 = vld [vmem:[#allocation2 + $0x38] sm:$0xf]
    %v137 = vld [vmem:[#allocation2 + $0x3c] sm:$0xf]
    %v138 = vld [vmem:[%s4] sm:$0x1]
    %v140 = vlaneseq
    %v141 = vshrl.u32 %v140, 7
    %v142 = vsub.s32 0, %v141
    %v143 = vrot.slane %v138, %v142
    %v161 = vunpack.c.l.b16 %v122
    %v162 = vunpack.c.l.b16 %v123
    %v163 = vunpack.c.l.b16 %v124
    %v164 = vunpack.c.l.b16 %v125
    %v165 = vunpack.c.l.b16 %v126
    %v166 = vunpack.c.l.b16 %v127
    %v167 = vunpack.c.l.b16 %v128
    %v168 = vunpack.c.l.b16 %v129
    %v169 = vunpack.c.l.b16 %v130
    %v170 = vunpack.c.l.b16 %v131
    %v171 = vunpack.c.l.b16 %v132
    %v172 = vunpack.c.l.b16 %v133
    %v173 = vunpack.c.l.b16 %v134
    %v174 = vunpack.c.l.b16 %v135
    %v175 = vunpack.c.l.b16 %v136
    %v176 = vunpack.c.l.b16 %v137
    %v177 = vpack.c.b16 %v162, %v161
    %v178 = vpack.c.b16 %v164, %v163
    %v179 = vpack.c.b16 %v166, %v165
    %v180 = vpack.c.b16 %v168, %v167
    %v181 = vpack.c.b16 %v170, %v169
    %v182 = vpack.c.b16 %v172, %v171
    %v183 = vpack.c.b16 %v174, %v173
    %v184 = vpack.c.b16 %v176, %v175
    %193 = vmatprep.subr.bf16.mxu0 0
    %194 = vmatpush1.bf16.msra.mxu0 %v177
    %195 = vmatprep.subr.bf16.mxu0 0
    %196 = vmatpush1.bf16.msra.mxu0 %v178
    %197 = vmatprep.subr.bf16.mxu0 0
    %198 = vmatpush1.bf16.msra.mxu0 %v179
    %199 = vmatprep.subr.bf16.mxu0 0
    %200 = vmatpush1.bf16.msra.mxu0 %v180
    %201 = vmatprep.subr.bf16.mxu0 0
    %202 = vmatpush1.bf16.msra.mxu0 %v181
    %203 = vmatprep.subr.bf16.mxu0 0
    %204 = vmatpush1.bf16.msra.mxu0 %v182
    %205 = vmatprep.subr.bf16.mxu0 0
    %206 = vmatpush1.bf16.msra.mxu0 %v183
    %207 = vmatprep.subr.bf16.mxu0 0
    %208 = vmatpush1.bf16.msra.mxu0 %v184
    %209 = vmatprep.subr.bf16.mxu0 0
    %210 = vmatpush1.bf16.msra.mxu0 0
    %211 = vmatprep.subr.bf16.mxu0 0
    %212 = vmatpush1.bf16.msra.mxu0 0
    %213 = vmatprep.subr.bf16.mxu0 0
    %214 = vmatpush1.bf16.msra.mxu0 0
    %215 = vmatprep.subr.bf16.mxu0 0
    %216 = vmatpush1.bf16.msra.mxu0 0
    %217 = vmatprep.subr.bf16.mxu0 0
    %218 = vmatpush1.bf16.msra.mxu0 0
    %219 = vmatprep.subr.bf16.mxu0 0
    %220 = vmatpush1.bf16.msra.mxu0 0
    %221 = vmatprep.subr.bf16.mxu0 0
    %222 = vmatpush1.bf16.msra.mxu0 0
    %223 = vmatprep.subr.bf16.mxu0 0
    %224 = vmatpush1.bf16.msra.mxu0 0
    %225 = vmatprep.mubr.bf16.mxu0 0
    %226 = vmatmul.mubr.bf16.gmra.mrb[0].mxu0 %v121
    %v227 = vpop.f32.mrb[0].mxu0
    %v228 = vadd.f32 %v143, %v227
    %v229 = vpop.f32.mrb[0].mxu0
    %v230 = vpop.f32.mrb[0].mxu0
    %v231 = vadd.f32 %v143, %v230
    %v232 = vpop.f32.mrb[0].mxu0
    %233 = vdwg.mxu0
    %v234 = vmax.f32 %v228, 0.0
    %v235 = vmax.f32 %v231, 0.0
    %v236 = vpack.c.bf16 %v235, %v234
    %v237 = vld [vmem:[#allocation4] sm:$0xf]
    %v238 = vld [vmem:[#allocation4 + $0x4] sm:$0xf]
    %v239 = vld [vmem:[#allocation4 + $0x8] sm:$0xf]
    %v240 = vld [vmem:[#allocation4 + $0xc] sm:$0xf]
    %v241 = vld [vmem:[#allocation4 + $0x10] sm:$0xf]
    %v242 = vld [vmem:[#allocation4 + $0x14] sm:$0xf]
    %v243 = vld [vmem:[#allocation4 + $0x18] sm:$0xf]
    %v244 = vld [vmem:[#allocation4 + $0x1c] sm:$0xf]
    %v245 = vld [vmem:[#allocation4 + $0x20] sm:$0xf]
    %v246 = vld [vmem:[#allocation4 + $0x24] sm:$0xf]
    %v247 = vld [vmem:[#allocation4 + $0x28] sm:$0xf]
    %v248 = vld [vmem:[#allocation4 + $0x2c] sm:$0xf]
    %v249 = vld [vmem:[#allocation4 + $0x30] sm:$0xf]
    %v250 = vld [vmem:[#allocation4 + $0x34] sm:$0xf]
    %v251 = vld [vmem:[#allocation4 + $0x38] sm:$0xf]
    %v252 = vld [vmem:[#allocation4 + $0x3c] sm:$0xf]
    %v253 = vld [vmem:[%s6] sm:$0x1]
    %v255 = vlaneseq
    %v256 = vshrl.u32 %v255, 7
    %v257 = vsub.s32 0, %v256
    %v258 = vrot.slane %v253, %v257
    %v276 = vunpack.c.l.b16 %v237
    %v277 = vunpack.c.l.b16 %v238
    %v278 = vunpack.c.l.b16 %v239
    %v279 = vunpack.c.l.b16 %v240
    %v280 = vunpack.c.l.b16 %v241
    %v281 = vunpack.c.l.b16 %v242
    %v282 = vunpack.c.l.b16 %v243
    %v283 = vunpack.c.l.b16 %v244
    %v284 = vunpack.c.l.b16 %v245
    %v285 = vunpack.c.l.b16 %v246
    %v286 = vunpack.c.l.b16 %v247
    %v287 = vunpack.c.l.b16 %v248
    %v288 = vunpack.c.l.b16 %v249
    %v289 = vunpack.c.l.b16 %v250
    %v290 = vunpack.c.l.b16 %v251
    %v291 = vunpack.c.l.b16 %v252
    %v292 = vpack.c.b16 %v277, %v276
    %v293 = vpack.c.b16 %v279, %v278
    %v294 = vpack.c.b16 %v281, %v280
    %v295 = vpack.c.b16 %v283, %v282
    %v296 = vpack.c.b16 %v285, %v284
    %v297 = vpack.c.b16 %v287, %v286
    %v298 = vpack.c.b16 %v289, %v288
    %v299 = vpack.c.b16 %v291, %v290
    %308 = vmatprep.subr.bf16.mxu0 0
    %309 = vmatpush1.bf16.msra.mxu0 %v292
    %310 = vmatprep.subr.bf16.mxu0 0
    %311 = vmatpush1.bf16.msra.mxu0 %v293
    %312 = vmatprep.subr.bf16.mxu0 0
    %313 = vmatpush1.bf16.msra.mxu0 %v294
    %314 = vmatprep.subr.bf16.mxu0 0
    %315 = vmatpush1.bf16.msra.mxu0 %v295
    %316 = vmatprep.subr.bf16.mxu0 0
    %317 = vmatpush1.bf16.msra.mxu0 %v296
    %318 = vmatprep.subr.bf16.mxu0 0
    %319 = vmatpush1.bf16.msra.mxu0 %v297
    %320 = vmatprep.subr.bf16.mxu0 0
    %321 = vmatpush1.bf16.msra.mxu0 %v298
    %322 = vmatprep.subr.bf16.mxu0 0
    %323 = vmatpush1.bf16.msra.mxu0 %v299
    %324 = vmatprep.subr.bf16.mxu0 0
    %325 = vmatpush1.bf16.msra.mxu0 0
    %326 = vmatprep.subr.bf16.mxu0 0
    %327 = vmatpush1.bf16.msra.mxu0 0
    %328 = vmatprep.subr.bf16.mxu0 0
    %329 = vmatpush1.bf16.msra.mxu0 0
    %330 = vmatprep.subr.bf16.mxu0 0
    %331 = vmatpush1.bf16.msra.mxu0 0
    %332 = vmatprep.subr.bf16.mxu0 0
    %333 = vmatpush1.bf16.msra.mxu0 0
    %334 = vmatprep.subr.bf16.mxu0 0
    %335 = vmatpush1.bf16.msra.mxu0 0
    %336 = vmatprep.subr.bf16.mxu0 0
    %337 = vmatpush1.bf16.msra.mxu0 0
    %338 = vmatprep.subr.bf16.mxu0 0
    %339 = vmatpush1.bf16.msra.mxu0 0
    %340 = vmatprep.mubr.bf16.mxu0 0
    %341 = vmatmul.mubr.bf16.gmra.mrb[0].mxu0 %v236
    %v342 = vpop.f32.mrb[0].mxu0
    %v343 = vadd.f32 %v258, %v342
    %v344 = vpop.f32.mrb[0].mxu0
    %v345 = vpop.f32.mrb[0].mxu0
    %v346 = vadd.f32 %v258, %v345
    %v347 = vpop.f32.mrb[0].mxu0
    %348 = vdwg.mxu0
    %349 = vmax.xlane.f32.xlu0 %v343
    %v350 = vpop.xlane.xlu0 %349
    %351 = vmax.xlane.f32.xlu0 %v346
    %v352 = vpop.xlane.xlu0 %351
    %v353 = vsub.f32 %v343, %v350
    %v354 = vsub.f32 %v346, %v352
    %v355 = vpack.c.bf16 %v354, %v353
    %v357 = vmul.bf16 %v355, 1069105081
    %v358 = vpow.bf16.pop %v357
    %v359 = vunpack.c.l.bf16 %v358
    %v360 = vunpack.c.h.bf16 %v358
    %361 = vadd.xlane.f32.xlu0 %v359
    %v362 = vpop.xlane.xlu0 %361
    %363 = vadd.xlane.f32.xlu0 %v360
    %v364 = vpop.xlane.xlu0 %363
    %v365 = vrcp.pop %v362
    %v366 = vrcp.pop %v364
    %v367 = vmul.f32 %v362, %v365
    %v368 = vmul.f32 %v364, %v366
    %v369 = vsub.f32 2.0, %v367
    %v370 = vsub.f32 2.0, %v368
    %v371 = vmul.f32 %v365, %v369
    %v372 = vmul.f32 %v366, %v370
    %v373 = vpack.c.bf16 %v372, %v371
    %v374 = vmul.bf16 %v358, %v373
    %v375 = vunpack.c.l.bf16 %v374
    %v376 = vunpack.c.h.bf16 %v374
    %377 = vst [vmem:[%s7] sm:$0xff] %v375
    %378 = vst [vmem:[%s7 + $0x8] sm:$0xff] %v376
    // Predicated region
    $region38: #{policy_forward.1} parent=1 // pred_check
      _
    $region39: #{policy_forward.1} parent=1 // pred_check_branch
      %380 = sbr.rel (0) target = $region41
    $region40: #{policy_forward.1} parent=1 // pred_region
      _
    $region41: #{policy_forward.1} parent=1 // pred_fallthru
      _
    // Predicated region
    $region42: #{policy_forward.1} parent=1 // pred_check
      _
    $region43: #{policy_forward.1} parent=1 // pred_check_branch
      %382 = sbr.rel (0) target = $region45
    $region44: #{policy_forward.1} parent=1 // pred_region
      _
    $region45: #{policy_forward.1} parent=1 // pred_fallthru
      _
    %383 = vsyncpa [#allocation3], 1
    %384 = vsyncpa [#allocation5], 1

// kernel: policy_forward.1
$region0: #{policy_forward.1}
  #allocation0 [shape = 'u32[]', space=smem, size = 0x4, offset = 0x4, fixed_abs, tag = 'smem constant byte address 0x4 - core index']
  #allocation1 [shape = 'u32[144,128]{1,0:T(1,128)}', space=vmem, size = 0x12000, scoped, tag = 'internal scratch']
  %s0 = inlined_call_operand.vmem [shape: bf16[16,4], index: 0, kind: input, shape index: {}]
  %s1 = inlined_call_operand.vmem [shape: bf16[4,128], index: 1, kind: input, shape index: {}]
  %s2 = inlined_call_operand.vmem [shape: f32[1,128], index: 2, kind: input, shape index: {}]
  %s3 = inlined_call_operand.hbm [shape: bf16[128,128], index: 3, kind: input, shape index: {}]
  %s4 = inlined_call_operand.vmem [shape: f32[1,128], index: 4, kind: input, shape index: {}]
  %s5 = inlined_call_operand.hbm [shape: bf16[128,128], index: 5, kind: input, shape index: {}]
  %s6 = inlined_call_operand.vmem [shape: f32[1,128], index: 6, kind: input, shape index: {}]
  %s7 = inlined_call_operand.vmem [shape: f32[16,128], index: 7, kind: output, shape index: {}]
  %s8 = sld [smem:[#allocation0]]
  $region46: #{policy_forward.1} parent=0
    _
  %s10 = ssub.s32 1, %s8
  %s11 = scalar_select 0, %s10, %s8
  $region1: #{policy_forward.1} parent=0
    #allocation2 [shape = 'u8[32768]{0}', space=vmem, size = 0x8000, scoped, tag = 'input window, operand 3, single buffered']
    #allocation3 [shape = 's32[1]{0}', space=sflag, size = 0x4, scoped, tag = 'scoped memory for policy_forward.1']
    #allocation4 [shape = 'u8[32768]{0}', space=vmem, size = 0x8000, scoped, tag = 'input window, operand 5, single buffered']
    #allocation5 [shape = 's32[1]{0}', space=sflag, size = 0x4, scoped, tag = 'scoped memory for policy_forward.1']
    %12 = vsyncpa [#allocation3], 0
    %13 = vsyncpa [#allocation5], 0
    // Predicated region
    $region2: #{policy_forward.1} parent=1 // pred_check
      _
    $region3: #{policy_forward.1} parent=1 // pred_check_branch
      %15 = sbr.rel (0) target = $region5
    $region4: #{policy_forward.1} parent=1 // pred_region
      _
    $region5: #{policy_forward.1} parent=1 // pred_fallthru
      _
    // Predicated region
    $region6: #{policy_forward.1} parent=1 // pred_check
      _
    $region7: #{policy_forward.1} parent=1 // pred_check_branch
      %17 = sbr.rel (0) target = $region9
    $region8: #{policy_forward.1} parent=1 // pred_region
      _
    $region9: #{policy_forward.1} parent=1 // pred_fallthru
      _
    // Predicated region
    $region10: #{policy_forward.1} parent=1 // pred_check
      _
    $region11: #{policy_forward.1} parent=1 // pred_check_branch
      %19 = sbr.rel (0) target = $region13
    $region12: #{policy_forward.1} parent=1 // pred_region
      _
    $region13: #{policy_forward.1} parent=1 // pred_fallthru
      _
    // Predicated region
    $region14: #{policy_forward.1} parent=1 // pred_check
      _
    $region15: #{policy_forward.1} parent=1 // pred_check_branch
      %21 = sbr.rel (0) target = $region17
    $region16: #{policy_forward.1} parent=1 // pred_region
      %s23 = ssub.s32 1024, 1024
      %24 = vsyncadd [#allocation3], %s23
      %s25 = sshll.u32 [#allocation2], 4
      %s26 = int_to_ptr.vmem [resolvable:$true] %s25
      %31 = dma.hbm_to_vmem [thread:$0]  %s3, 1024, %s26, [#allocation3], 64, 64, 4
    $region17: #{policy_forward.1} parent=1 // pred_fallthru
      _
    // Predicated region
    $region18: #{policy_forward.1} parent=1 // pred_check
      _
    $region19: #{policy_forward.1} parent=1 // pred_check_branch
      %33 = sbr.rel (0) target = $region21
    $region20: #{policy_forward.1} parent=1 // pred_region
      _
    $region21: #{policy_forward.1} parent=1 // pred_fallthru
      _
    // Predicated region
    $region22: #{policy_forward.1} parent=1 // pred_check
      _
    $region23: #{policy_forward.1} parent=1 // pred_check_branch
      %35 = sbr.rel (0) target = $region25
    $region24: #{policy_forward.1} parent=1 // pred_region
      %s37 = ssub.s32 1024, 1024
      %38 = vsyncadd [#allocation5], %s37
      %s39 = sshll.u32 [#allocation4], 4
      %s40 = int_to_ptr.vmem [resolvable:$true] %s39
      %45 = dma.hbm_to_vmem [thread:$0]  %s5, 1024, %s40, [#allocation5], 64, 64, 4
    $region25: #{policy_forward.1} parent=1 // pred_fallthru
      _
    // Predicated region
    $region26: #{policy_forward.1} parent=1 // pred_check
      _
    $region27: #{policy_forward.1} parent=1 // pred_check_branch
      %47 = sbr.rel (0) target = $region29
    $region28: #{policy_forward.1} parent=1 // pred_region
      _
    $region29: #{policy_forward.1} parent=1 // pred_fallthru
      _
    // Predicated region
    $region30: #{policy_forward.1} parent=1 // pred_check
      _
    $region31: #{policy_forward.1} parent=1 // pred_check_branch
      %49 = sbr.rel (0) target = $region33
    $region32: #{policy_forward.1} parent=1 // pred_region
      %50 = dma.done [#allocation3], 1024
    $region33: #{policy_forward.1} parent=1 // pred_fallthru
      _
    // Predicated region
    $region34: #{policy_forward.1} parent=1 // pred_check
      _
    $region35: #{policy_forward.1} parent=1 // pred_check_branch
      %52 = sbr.rel (0) target = $region37
    $region36: #{policy_forward.1} parent=1 // pred_region
      %53 = dma.done [#allocation5], 1024
    $region37: #{policy_forward.1} parent=1 // pred_fallthru
      _
    %v55 = vld [vmem:[%s0] sm:$0xf]
    %v56 = vld [vmem:[%s0 + $0x4] sm:$0xf]
    %v57 = vld [vmem:[%s1] sm:$0x3]
    %v58 = vld [vmem:[%s2] sm:$0x1]
    %v60 = vlaneseq
    %v61 = vshrl.u32 %v60, 7
    %v62 = vsub.s32 0, %v61
    %v63 = vrot.slane %v58, %v62
    %v67 = vunpack.c.l.b16 %v55
    %v68 = vunpack.c.l.b16 %v56
    %v69 = vpack.c.b16 %v68, %v67
    %vm70 = vcmask 31744
    %v72 = vsel %vm70, %v69, 0
    %vm74 = vcmask 1041408
    %v76 = vsel %vm74, %v57, 0
    %78 = vmatprep.subr.bf16.mxu0 0
    %79 = vmatpush1.bf16.msra.mxu0 %v76
    %80 = vmatprep.subr.bf16.mxu0 0
    %81 = vmatpush1.bf16.msra.mxu0 0
    %82 = vmatprep.subr.bf16.mxu0 0
    %83 = vmatpush1.bf16.msra.mxu0 0
    %84 = vmatprep.subr.bf16.mxu0 0
    %85 = vmatpush1.bf16.msra.mxu0 0
    %86 = vmatprep.subr.bf16.mxu0 0
    %87 = vmatpush1.bf16.msra.mxu0 0
    %88 = vmatprep.subr.bf16.mxu0 0
    %89 = vmatpush1.bf16.msra.mxu0 0
    %90 = vmatprep.subr.bf16.mxu0 0
    %91 = vmatpush1.bf16.msra.mxu0 0
    %92 = vmatprep.subr.bf16.mxu0 0
    %93 = vmatpush1.bf16.msra.mxu0 0
    %94 = vmatprep.subr.bf16.mxu0 0
    %95 = vmatpush1.bf16.msra.mxu0 0
    %96 = vmatprep.subr.bf16.mxu0 0
    %97 = vmatpush1.bf16.msra.mxu0 0
    %98 = vmatprep.subr.bf16.mxu0 0
    %99 = vmatpush1.bf16.msra.mxu0 0
    %100 = vmatprep.subr.bf16.mxu0 0
    %101 = vmatpush1.bf16.msra.mxu0 0
    %102 = vmatprep.subr.bf16.mxu0 0
    %103 = vmatpush1.bf16.msra.mxu0 0
    %104 = vmatprep.subr.bf16.mxu0 0
    %105 = vmatpush1.bf16.msra.mxu0 0
    %106 = vmatprep.subr.bf16.mxu0 0
    %107 = vmatpush1.bf16.msra.mxu0 0
    %108 = vmatprep.subr.bf16.mxu0 0
    %109 = vmatpush1.bf16.msra.mxu0 0
    %110 = vmatprep.mubr.bf16.mxu0 0
    %111 = vmatmul.mubr.bf16.gmra.mrb[0].mxu0 %v72
    %v112 = vpop.f32.mrb[0].mxu0
    %v113 = vadd.f32 %v63, %v112
    %v114 = vpop.f32.mrb[0].mxu0
    %v115 = vpop.f32.mrb[0].mxu0
    %v116 = vadd.f32 %v63, %v115
    %v117 = vpop.f32.mrb[0].mxu0
    %118 = vdwg.mxu0
    %v119 = vmax.f32 %v113, 0.0
    %v120 = vmax.f32 %v116, 0.0
    %v121 = vpack.c.bf16 %v120, %v119
    %v122 = vld [vmem:[#allocation2] sm:$0xf]
    %v123 = vld [vmem:[#allocation2 + $0x4] sm:$0xf]
    %v124 = vld [vmem:[#allocation2 + $0x8] sm:$0xf]
    %v125 = vld [vmem:[#allocation2 + $0xc] sm:$0xf]
    %v126 = vld [vmem:[#allocation2 + $0x10] sm:$0xf]
    %v127 = vld [vmem:[#allocation2 + $0x14] sm:$0xf]
    %v128 = vld [vmem:[#allocation2 + $0x18] sm:$0xf]
    %v129 = vld [vmem:[#allocation2 + $0x1c] sm:$0xf]
    %v130 = vld [vmem:[#allocation2 + $0x20] sm:$0xf]
    %v131 = vld [vmem:[#allocation2 + $0x24] sm:$0xf]
    %v132 = vld [vmem:[#allocation2 + $0x28] sm:$0xf]
    %v133 = vld [vmem:[#allocation2 + $0x2c] sm:$0xf]
    %v134 = vld [vmem:[#allocation2 + $0x30] sm:$0xf]
    %v135 = vld [vmem:[#allocation2 + $0x34] sm:$0xf]
    %v136 = vld [vmem:[#allocation2 + $0x38] sm:$0xf]
    %v137 = vld [vmem:[#allocation2 + $0x3c] sm:$0xf]
    %v138 = vld [vmem:[%s4] sm:$0x1]
    %v140 = vlaneseq
    %v141 = vshrl.u32 %v140, 7
    %v142 = vsub.s32 0, %v141
    %v143 = vrot.slane %v138, %v142
    %v161 = vunpack.c.l.b16 %v122
    %v162 = vunpack.c.l.b16 %v123
    %v163 = vunpack.c.l.b16 %v124
    %v164 = vunpack.c.l.b16 %v125
    %v165 = vunpack.c.l.b16 %v126
    %v166 = vunpack.c.l.b16 %v127
    %v167 = vunpack.c.l.b16 %v128
    %v168 = vunpack.c.l.b16 %v129
    %v169 = vunpack.c.l.b16 %v130
    %v170 = vunpack.c.l.b16 %v131
    %v171 = vunpack.c.l.b16 %v132
    %v172 = vunpack.c.l.b16 %v133
    %v173 = vunpack.c.l.b16 %v134
    %v174 = vunpack.c.l.b16 %v135
    %v175 = vunpack.c.l.b16 %v136
    %v176 = vunpack.c.l.b16 %v137
    %v177 = vpack.c.b16 %v162, %v161
    %v178 = vpack.c.b16 %v164, %v163
    %v179 = vpack.c.b16 %v166, %v165
    %v180 = vpack.c.b16 %v168, %v167
    %v181 = vpack.c.b16 %v170, %v169
    %v182 = vpack.c.b16 %v172, %v171
    %v183 = vpack.c.b16 %v174, %v173
    %v184 = vpack.c.b16 %v176, %v175
    %193 = vmatprep.subr.bf16.mxu0 0
    %194 = vmatpush1.bf16.msra.mxu0 %v177
    %195 = vmatprep.subr.bf16.mxu0 0
    %196 = vmatpush1.bf16.msra.mxu0 %v178
    %197 = vmatprep.subr.bf16.mxu0 0
    %198 = vmatpush1.bf16.msra.mxu0 %v179
    %199 = vmatprep.subr.bf16.mxu0 0
    %200 = vmatpush1.bf16.msra.mxu0 %v180
    %201 = vmatprep.subr.bf16.mxu0 0
    %202 = vmatpush1.bf16.msra.mxu0 %v181
    %203 = vmatprep.subr.bf16.mxu0 0
    %204 = vmatpush1.bf16.msra.mxu0 %v182
    %205 = vmatprep.subr.bf16.mxu0 0
    %206 = vmatpush1.bf16.msra.mxu0 %v183
    %207 = vmatprep.subr.bf16.mxu0 0
    %208 = vmatpush1.bf16.msra.mxu0 %v184
    %209 = vmatprep.subr.bf16.mxu0 0
    %210 = vmatpush1.bf16.msra.mxu0 0
    %211 = vmatprep.subr.bf16.mxu0 0
    %212 = vmatpush1.bf16.msra.mxu0 0
    %213 = vmatprep.subr.bf16.mxu0 0
    %214 = vmatpush1.bf16.msra.mxu0 0
    %215 = vmatprep.subr.bf16.mxu0 0
    %216 = vmatpush1.bf16.msra.mxu0 0
    %217 = vmatprep.subr.bf16.mxu0 0
    %218 = vmatpush1.bf16.msra.mxu0 0
    %219 = vmatprep.subr.bf16.mxu0 0
    %220 = vmatpush1.bf16.msra.mxu0 0
    %221 = vmatprep.subr.bf16.mxu0 0
    %222 = vmatpush1.bf16.msra.mxu0 0
    %223 = vmatprep.subr.bf16.mxu0 0
    %224 = vmatpush1.bf16.msra.mxu0 0
    %225 = vmatprep.mubr.bf16.mxu0 0
    %226 = vmatmul.mubr.bf16.gmra.mrb[0].mxu0 %v121
    %v227 = vpop.f32.mrb[0].mxu0
    %v228 = vadd.f32 %v143, %v227
    %v229 = vpop.f32.mrb[0].mxu0
    %v230 = vpop.f32.mrb[0].mxu0
    %v231 = vadd.f32 %v143, %v230
    %v232 = vpop.f32.mrb[0].mxu0
    %233 = vdwg.mxu0
    %v234 = vmax.f32 %v228, 0.0
    %v235 = vmax.f32 %v231, 0.0
    %v236 = vpack.c.bf16 %v235, %v234
    %v237 = vld [vmem:[#allocation4] sm:$0xf]
    %v238 = vld [vmem:[#allocation4 + $0x4] sm:$0xf]
    %v239 = vld [vmem:[#allocation4 + $0x8] sm:$0xf]
    %v240 = vld [vmem:[#allocation4 + $0xc] sm:$0xf]
    %v241 = vld [vmem:[#allocation4 + $0x10] sm:$0xf]
    %v242 = vld [vmem:[#allocation4 + $0x14] sm:$0xf]
    %v243 = vld [vmem:[#allocation4 + $0x18] sm:$0xf]
    %v244 = vld [vmem:[#allocation4 + $0x1c] sm:$0xf]
    %v245 = vld [vmem:[#allocation4 + $0x20] sm:$0xf]
    %v246 = vld [vmem:[#allocation4 + $0x24] sm:$0xf]
    %v247 = vld [vmem:[#allocation4 + $0x28] sm:$0xf]
    %v248 = vld [vmem:[#allocation4 + $0x2c] sm:$0xf]
    %v249 = vld [vmem:[#allocation4 + $0x30] sm:$0xf]
    %v250 = vld [vmem:[#allocation4 + $0x34] sm:$0xf]
    %v251 = vld [vmem:[#allocation4 + $0x38] sm:$0xf]
    %v252 = vld [vmem:[#allocation4 + $0x3c] sm:$0xf]
    %v253 = vld [vmem:[%s6] sm:$0x1]
    %v255 = vlaneseq
    %v256 = vshrl.u32 %v255, 7
    %v257 = vsub.s32 0, %v256
    %v258 = vrot.slane %v253, %v257
    %v276 = vunpack.c.l.b16 %v237
    %v277 = vunpack.c.l.b16 %v238
    %v278 = vunpack.c.l.b16 %v239
    %v279 = vunpack.c.l.b16 %v240
    %v280 = vunpack.c.l.b16 %v241
    %v281 = vunpack.c.l.b16 %v242
    %v282 = vunpack.c.l.b16 %v243
    %v283 = vunpack.c.l.b16 %v244
    %v284 = vunpack.c.l.b16 %v245
    %v285 = vunpack.c.l.b16 %v246
    %v286 = vunpack.c.l.b16 %v247
    %v287 = vunpack.c.l.b16 %v248
    %v288 = vunpack.c.l.b16 %v249
    %v289 = vunpack.c.l.b16 %v250
    %v290 = vunpack.c.l.b16 %v251
    %v291 = vunpack.c.l.b16 %v252
    %v292 = vpack.c.b16 %v277, %v276
    %v293 = vpack.c.b16 %v279, %v278
    %v294 = vpack.c.b16 %v281, %v280
    %v295 = vpack.c.b16 %v283, %v282
    %v296 = vpack.c.b16 %v285, %v284
    %v297 = vpack.c.b16 %v287, %v286
    %v298 = vpack.c.b16 %v289, %v288
    %v299 = vpack.c.b16 %v291, %v290
    %308 = vmatprep.subr.bf16.mxu0 0
    %309 = vmatpush1.bf16.msra.mxu0 %v292
    %310 = vmatprep.subr.bf16.mxu0 0
    %311 = vmatpush1.bf16.msra.mxu0 %v293
    %312 = vmatprep.subr.bf16.mxu0 0
    %313 = vmatpush1.bf16.msra.mxu0 %v294
    %314 = vmatprep.subr.bf16.mxu0 0
    %315 = vmatpush1.bf16.msra.mxu0 %v295
    %316 = vmatprep.subr.bf16.mxu0 0
    %317 = vmatpush1.bf16.msra.mxu0 %v296
    %318 = vmatprep.subr.bf16.mxu0 0
    %319 = vmatpush1.bf16.msra.mxu0 %v297
    %320 = vmatprep.subr.bf16.mxu0 0
    %321 = vmatpush1.bf16.msra.mxu0 %v298
    %322 = vmatprep.subr.bf16.mxu0 0
    %323 = vmatpush1.bf16.msra.mxu0 %v299
    %324 = vmatprep.subr.bf16.mxu0 0
    %325 = vmatpush1.bf16.msra.mxu0 0
    %326 = vmatprep.subr.bf16.mxu0 0
    %327 = vmatpush1.bf16.msra.mxu0 0
    %328 = vmatprep.subr.bf16.mxu0 0
    %329 = vmatpush1.bf16.msra.mxu0 0
    %330 = vmatprep.subr.bf16.mxu0 0
    %331 = vmatpush1.bf16.msra.mxu0 0
    %332 = vmatprep.subr.bf16.mxu0 0
    %333 = vmatpush1.bf16.msra.mxu0 0
    %334 = vmatprep.subr.bf16.mxu0 0
    %335 = vmatpush1.bf16.msra.mxu0 0
    %336 = vmatprep.subr.bf16.mxu0 0
    %337 = vmatpush1.bf16.msra.mxu0 0
    %338 = vmatprep.subr.bf16.mxu0 0
    %339 = vmatpush1.bf16.msra.mxu0 0
    %340 = vmatprep.mubr.bf16.mxu0 0
    %341 = vmatmul.mubr.bf16.gmra.mrb[0].mxu0 %v236
    %v342 = vpop.f32.mrb[0].mxu0
    %v343 = vadd.f32 %v258, %v342
    %v344 = vpop.f32.mrb[0].mxu0
    %v345 = vpop.f32.mrb[0].mxu0
    %v346 = vadd.f32 %v258, %v345
    %v347 = vpop.f32.mrb[0].mxu0
    %348 = vdwg.mxu0
    %349 = vmax.xlane.f32.xlu0 %v343
    %v350 = vpop.xlane.xlu0 %349
    %351 = vmax.xlane.f32.xlu0 %v346
    %v352 = vpop.xlane.xlu0 %351
    %v353 = vsub.f32 %v343, %v350
    %v354 = vsub.f32 %v346, %v352
    %v355 = vpack.c.bf16 %v354, %v353
    %v357 = vmul.bf16 %v355, 1069105081
    %v358 = vpow.bf16.pop %v357
    %v359 = vunpack.c.l.bf16 %v358
    %v360 = vunpack.c.h.bf16 %v358
    %361 = vadd.xlane.f32.xlu0 %v359
    %v362 = vpop.xlane.xlu0 %361
    %363 = vadd.xlane.f32.xlu0 %v360
    %v364 = vpop.xlane.xlu0 %363
    %v365 = vrcp.pop %v362
    %v366 = vrcp.pop %v364
    %v367 = vmul.f32 %v362, %v365
    %v368 = vmul.f32 %v364, %v366
    %v369 = vsub.f32 2.0, %v367
    %v370 = vsub.f32 2.0, %v368
    %v371 = vmul.f32 %v365, %v369
    %v372 = vmul.f32 %v366, %v370
    %v373 = vpack.c.bf16 %v372, %v371
    %v374 = vmul.bf16 %v358, %v373
    %v375 = vunpack.c.l.bf16 %v374
    %v376 = vunpack.c.h.bf16 %v374
    %377 = vst [vmem:[%s7] sm:$0xff] %v375
    %378 = vst [vmem:[%s7 + $0x8] sm:$0xff] %v376
    // Predicated region
    $region38: #{policy_forward.1} parent=1 // pred_check
      _
    $region39: #{policy_forward.1} parent=1 // pred_check_branch
      %380 = sbr.rel (0) target = $region41
    $region40: #{policy_forward.1} parent=1 // pred_region
      _
    $region41: #{policy_forward.1} parent=1 // pred_fallthru
      _
    // Predicated region
    $region42: #{policy_forward.1} parent=1 // pred_check
      _
    $region43: #{policy_forward.1} parent=1 // pred_check_branch
      %382 = sbr.rel (0) target = $region45
    $region44: #{policy_forward.1} parent=1 // pred_region
      _
    $region45: #{policy_forward.1} parent=1 // pred_fallthru
      _
    %383 = vsyncpa [#allocation3], 1
    %384 = vsyncpa [#allocation5], 1

</llo_original>
